<compile_context>
chip_gen: v7x
topology: tpu7x:2x2x1
jax: 0.10.0
libtpu: 0.0.40
codegen_flags: <defaults>
</compile_context>

<pallas_src>
import functools

import jax
import jax.numpy as jnp
from jax.experimental import pallas as pl
from jax.experimental.pallas import tpu as pltpu


_VMEM_LIMIT = 48 * 1024 * 1024        # safe on v7x (64 MiB phys); ample on v5e/v6e
_TARGET_BLOCK_BYTES = 4 * 1024 * 1024  # ~4 MiB x blocks -> >=85% of HBM roofline


def _block_dims(R, T, itemsize):
    """Pick (RR, TT) block dims for a (R, T) array: ~_TARGET_BLOCK_BYTES per
    block, lane dim a multiple of 128 (or full T), row dim a multiple of the
    sublane packing (or full R)."""
    row_pack = 8 * max(1, 4 // itemsize)          # f32: 8, bf16: 16, int8: 32
    if R * T * itemsize <= _TARGET_BLOCK_BYTES:
        return R, T                               # whole array is one block
    if T * row_pack * itemsize <= _TARGET_BLOCK_BYTES:
        rr = max(row_pack,
                 (_TARGET_BLOCK_BYTES // (T * itemsize)) // row_pack * row_pack)
        return min(rr, R), T                      # full (contiguous) T axis
    tt = max(128,
             (_TARGET_BLOCK_BYTES // (row_pack * itemsize)) // 128 * 128)
    return min(row_pack, R), min(tt, T)


# --------------------------------------------------------------------------- #
# Kernels                                                                      #
# --------------------------------------------------------------------------- #
def _stats_kernel(x_ref, sum_ref, ssq_ref, *, t_total, tt, need_mask):
    """Per-row partial sum and block-mean-shifted partial sum of squares.

    Writes one (RR, 1) partial per grid point; no resident accumulator, so
    both grid axes are megacore-parallel."""
    x = x_ref[...].astype(jnp.float32)                       # (RR, TT)
    if need_mask:
        t0 = pl.program_id(1) * tt
        col = jax.lax.broadcasted_iota(jnp.int32, x.shape, 1)
        valid = (col + t0) < t_total
        x = jnp.where(valid, x, 0.0)
        cnt = jnp.sum(valid.astype(jnp.float32), axis=-1, keepdims=True)
    else:
        cnt = jnp.float32(tt)

    s = jnp.sum(x, axis=-1, keepdims=True)                   # (RR, 1)
    m = s / cnt                                              # block-local row mean
    d = x - m
    if need_mask:
        d = jnp.where(valid, d, 0.0)
    sum_ref[...] = s
    ssq_ref[...] = jnp.sum(d * d, axis=-1, keepdims=True)    # (RR, 1)


def _apply_kernel(scale_ref, bias_ref, x_ref, out_ref):
    """out = x * scale + bias  (bias = scale * loc); f32 math, native-dtype I/O."""
    x = x_ref[...].astype(jnp.float32)                       # (RR, TT)
    out_ref[...] = (x * scale_ref[...] + bias_ref[...]).astype(out_ref.dtype)


# --------------------------------------------------------------------------- #
# Wrappers                                                                     #
# --------------------------------------------------------------------------- #
def _channel_stats(x2d, B, C):
    """Per-channel mean / unbiased std over (B, T): one fused, fully parallel
    sweep producing (gt, R, 1) partials, combined in the wrapper."""
    R, T = x2d.shape
    RR, TT = _block_dims(R, T, x2d.dtype.itemsize)
    gr, gt = pl.cdiv(R, RR), pl.cdiv(T, TT)
    need_mask = (T % TT) != 0

    kernel = functools.partial(_stats_kernel, t_total=T, tt=TT, need_mask=need_mask)
    part_sum, part_ssq = pl.pallas_call(
        kernel,
        grid=(gr, gt),
        in_specs=[pl.BlockSpec((RR, TT), lambda r, t: (r, t))],
        out_specs=[pl.BlockSpec((None, RR, 1), lambda r, t: (t, r, 0)),
                   pl.BlockSpec((None, RR, 1), lambda r, t: (t, r, 0))],
        out_shape=(jax.ShapeDtypeStruct((gt, R, 1), jnp.float32),
                   jax.ShapeDtypeStruct((gt, R, 1), jnp.float32)),
        compiler_params=pltpu.CompilerParams(
            dimension_semantics=("parallel", "parallel"),
            vmem_limit_bytes=_VMEM_LIMIT),
    )(x2d)

    # Combine partials (tiny arrays) with Chan's parallel-variance formula:
    #   M2_total = sum_g [ M2_g + n_g * (mean_g - mean)^2 ]
    n = B * T
    s = part_sum[..., 0]                                     # (gt, R)
    m2 = part_ssq[..., 0]                                    # (gt, R)
    cnt = jnp.minimum(TT, T - jnp.arange(gt) * TT).astype(jnp.float32)[:, None]
    mean_blk = s / cnt                                       # (gt, R)
    sum_c = s.reshape(gt, B, C).sum(axis=(0, 1))             # (C,)
    mean_c = sum_c / n
    delta = mean_blk - jnp.tile(mean_c, B)[None, :]          # (gt, R)
    m2_c = (m2 + cnt * delta * delta).reshape(gt, B, C).sum(axis=(0, 1))
    # torch.std default is unbiased (N - 1).
    std = jnp.sqrt(jnp.maximum(m2_c, 0.0) / (n - 1))
    return mean_c, std                                       # (C,), (C,) f32


def _apply(x2d, scale_rows, bias_rows):
    R, T = x2d.shape
    RR, TT = _block_dims(R, T, x2d.dtype.itemsize)
    gr, gt = pl.cdiv(R, RR), pl.cdiv(T, TT)
    return pl.pallas_call(
        _apply_kernel,
        grid=(gr, gt),
        in_specs=[pl.BlockSpec((RR, 1), lambda r, t: (r, 0)),
                  pl.BlockSpec((RR, 1), lambda r, t: (r, 0)),
                  pl.BlockSpec((RR, TT), lambda r, t: (r, t))],
        out_specs=pl.BlockSpec((RR, TT), lambda r, t: (r, t)),
        out_shape=jax.ShapeDtypeStruct((R, T), x2d.dtype),
        compiler_params=pltpu.CompilerParams(
            dimension_semantics=("parallel", "parallel"),
            vmem_limit_bytes=_VMEM_LIMIT),
    )(scale_rows, bias_rows, x2d)


def actnorm_forward(x, loc=None, scale=None, *, initialized=False, logdet=True):
    """Mirrors ActNorm.forward.

    Returns ((out, logdet), new_loc, new_scale) when logdet=True, else
    (out, new_loc, new_scale).  Parameters keep PyTorch's (1, C, 1) shape and
    the output keeps the input dtype.  (PyTorch's in-place parameter update on
    first call is modeled by returning new_loc / new_scale.)
    """
    B, C, T = x.shape
    x2d = x.reshape(B * C, T)                                # free contiguous view

    if not initialized:
        mean, std = _channel_stats(x2d, B, C)                # (C,) f32 each
        loc_c = -mean                                        # loc.data.copy_(-mean)
        scale_c = 1.0 / (std + 1e-6)                         # scale.data.copy_(1/(std+1e-6))
        new_loc = loc_c.reshape(1, C, 1)
        new_scale = scale_c.reshape(1, C, 1)
    else:
        loc_c = loc.reshape(C).astype(jnp.float32)
        scale_c = scale.reshape(C).astype(jnp.float32)
        new_loc, new_scale = loc, scale

    # Per-row (B*C, 1) params; fold loc into a bias so the kernel is mul+add.
    scale_rows = jnp.tile(scale_c, B).reshape(B * C, 1)
    bias_rows = jnp.tile(scale_c * loc_c, B).reshape(B * C, 1)

    out = _apply(x2d, scale_rows, bias_rows).reshape(B, C, T)

    if logdet:
        # Depends only on C scale values -> trivially cheap in the wrapper.
        logdet_val = jnp.sum(jnp.log(jnp.abs(scale_c))) * (B * T)
        return (out, logdet_val), new_loc, new_scale
    return out, new_loc, new_scale


# --------------------------------------------------------------------------- #
# Pure-JAX reference & self-test                                               #
# --------------------------------------------------------------------------- #
def _reference(x, loc, scale, initialized):
    B, C, T = x.shape
    xf = x.astype(jnp.float32)
    if not initialized:
        flat = jnp.transpose(xf, (1, 0, 2)).reshape(C, -1)
        mean = jnp.mean(flat, axis=1).reshape(1, C, 1)
        std = jnp.std(flat, axis=1, ddof=1).reshape(1, C, 1)
        loc = -mean
        scale = 1.0 / (std + 1e-6)
    out = scale * (xf + loc)
    ld = jnp.sum(jnp.log(jnp.abs(scale))) * B * T
    return out, ld, loc, scale


if __name__ == "__main__":
    B, C, T = 2, 4, 16
    key = jax.random.PRNGKey(0)
    x = jax.random.normal(key, (B, C, T), dtype=jnp.float32) * 1.5 + 0.3

    # Same shapes as the nn.Parameter init in __init__.
    loc0 = jnp.zeros((1, C, 1), jnp.float32)
    scale0 = jnp.ones((1, C, 1), jnp.float32)

    # --- path 1: first call (data-dependent initialization), logdet=True ---
    (out, ld), new_loc, new_scale = actnorm_forward(
        x, loc0, scale0, initialized=False, logdet=True)
    out = jax.block_until_ready(out)
    ld = jax.block_until_ready(ld)
    out_ref, ld_ref, loc_ref_, scale_ref_ = _reference(x, loc0, scale0, False)
    assert jnp.allclose(out, out_ref, atol=1e-4, rtol=1e-4)
    assert jnp.allclose(ld, ld_ref, atol=1e-3, rtol=1e-4)
    assert jnp.allclose(new_loc, loc_ref_, atol=1e-5)
    assert jnp.allclose(new_scale, scale_ref_, atol=1e-4)

    # --- path 2: already initialized (pretrained=True), logdet=True ---
    (out2, ld2), _, _ = actnorm_forward(
        x, new_loc, new_scale, initialized=True, logdet=True)
    out2 = jax.block_until_ready(out2)
    out2_ref, ld2_ref, _, _ = _reference(x, new_loc, new_scale, True)
    assert jnp.allclose(out2, out2_ref, atol=1e-4, rtol=1e-4)
    assert jnp.allclose(ld2, ld2_ref, atol=1e-3, rtol=1e-4)

    # --- path 3: logdet=False returns just the normalized output ---
    out3, _, _ = actnorm_forward(
        x, new_loc, new_scale, initialized=True, logdet=False)
    out3 = jax.block_until_ready(out3)
    assert jnp.allclose(out3, out2_ref, atol=1e-4, rtol=1e-4)

    # --- path 4: native-dtype I/O (bf16 stays bf16 through the kernel) ---
    x_bf16 = x.astype(jnp.bfloat16)
    (out4, ld4), _, _ = actnorm_forward(
        x_bf16, new_loc, new_scale, initialized=True, logdet=True)
    out4 = jax.block_until_ready(out4)
    assert out4.dtype == jnp.bfloat16
    assert jnp.allclose(out4.astype(jnp.float32), out2_ref, atol=1e-1, rtol=5e-2)
    assert jnp.allclose(ld4, ld2_ref, atol=1e-3, rtol=1e-4)

    # --- path 5: force multi-block tiling with row & lane remainders so the
    # cdiv grid + masking + partial-sum combination paths are exercised at
    # small shapes (shrink the per-block byte target for this test only). ---
    _TARGET_BLOCK_BYTES = 2048
    B5, C5, T5 = 3, 4, 200          # R=12 (row remainder vs RR=8), T=200 (lane rem vs 128)
    x5 = jax.random.normal(jax.random.PRNGKey(1), (B5, C5, T5), jnp.float32) * 2.0 - 0.7
    (out5, ld5), loc5, scale5 = actnorm_forward(x5, initialized=False, logdet=True)
    out5 = jax.block_until_ready(out5)
    out5_ref, ld5_ref, loc5_ref, scale5_ref = _reference(x5, None, None, False)
    assert jnp.allclose(out5, out5_ref, atol=1e-4, rtol=1e-4)
    assert jnp.allclose(ld5, ld5_ref, atol=1e-3, rtol=1e-4)
    assert jnp.allclose(loc5, loc5_ref, atol=1e-5)
    assert jnp.allclose(scale5, scale5_ref, atol=1e-4)
    _TARGET_BLOCK_BYTES = 4 * 1024 * 1024

    print("KERNEL_OK")
</pallas_src>

<mosaic_0001>
module attributes {stable_mosaic.version = 11 : i64} {
  func.func @_stats_kernel(%arg0: i32, %arg1: i32, %arg2: memref<8x16xf32, #tpu.memory_space<vmem>>, %arg3: memref<1x8x1xf32, #tpu.memory_space<vmem>>, %arg4: memref<1x8x1xf32, #tpu.memory_space<vmem>>) attributes {dimension_semantics = [#tpu.dimension_semantics<parallel>, #tpu.dimension_semantics<parallel>], iteration_bounds = array<i64: 1, 1>, scalar_prefetch = 0 : i64, scratch_operands = 0 : i64, tpu.core_type = #tpu.core_type<tc>, window_params = [{transform_indices = @transform_0, window_bounds = array<i64: 8, 16>}, {transform_indices = @transform_1, window_bounds = array<i64: 1, 8, 1>}, {transform_indices = @transform_2, window_bounds = array<i64: 1, 8, 1>}]} {
    %c0 = arith.constant 0 : index
    %c0_0 = arith.constant 0 : index
    %0 = vector.load %arg2[%c0, %c0_0] : memref<8x16xf32, #tpu.memory_space<vmem>>, vector<8x16xf32>
    %cst = arith.constant dense<0.000000e+00> : vector<8xf32>
    %1 = vector.multi_reduction <add>, %0, %cst [1] : vector<8x16xf32> to vector<8xf32>
    %2 = vector.shape_cast %1 : vector<8xf32> to vector<8x1xf32>
    %cst_1 = arith.constant 1.600000e+01 : f32
    %3 = vector.broadcast %cst_1 : f32 to vector<8x1xf32>
    %4 = arith.divf %2, %3 : vector<8x1xf32>
    %5 = vector.broadcast %4 : vector<8x1xf32> to vector<8x16xf32>
    %6 = arith.subf %0, %5 : vector<8x16xf32>
    %c0_2 = arith.constant 0 : index
    %c0_3 = arith.constant 0 : index
    %c0_4 = arith.constant 0 : index
    %7 = vector.load %arg3[%c0_2, %c0_3, %c0_4] : memref<1x8x1xf32, #tpu.memory_space<vmem>>, vector<1x8x1xf32>
    %8 = vector.shape_cast %7 : vector<1x8x1xf32> to vector<8x1xf32>
    %9 = vector.shape_cast %2 : vector<8x1xf32> to vector<1x8x1xf32>
    tpu.vector_store %arg3[%c0_2, %c0_3, %c0_4], %9 {strides = array<i32>} : memref<1x8x1xf32, #tpu.memory_space<vmem>>, vector<1x8x1xf32>,
    %10 = arith.mulf %6, %6 : vector<8x16xf32>
    %cst_5 = arith.constant dense<0.000000e+00> : vector<8xf32>
    %11 = vector.multi_reduction <add>, %10, %cst_5 [1] : vector<8x16xf32> to vector<8xf32>
    %12 = vector.shape_cast %11 : vector<8xf32> to vector<8x1xf32>
    %c0_6 = arith.constant 0 : index
    %c0_7 = arith.constant 0 : index
    %c0_8 = arith.constant 0 : index
    %13 = vector.load %arg4[%c0_6, %c0_7, %c0_8] : memref<1x8x1xf32, #tpu.memory_space<vmem>>, vector<1x8x1xf32>
    %14 = vector.shape_cast %13 : vector<1x8x1xf32> to vector<8x1xf32>
    %15 = vector.shape_cast %12 : vector<8x1xf32> to vector<1x8x1xf32>
    tpu.vector_store %arg4[%c0_6, %c0_7, %c0_8], %15 {strides = array<i32>} : memref<1x8x1xf32, #tpu.memory_space<vmem>>, vector<1x8x1xf32>,
    return
  }
  func.func @transform_0(%arg0: i32, %arg1: i32) -> (i32, i32) {
    %c0_i32 = arith.constant 0 : i32
    return %arg0, %arg1 : i32, i32
  }
  func.func @transform_1(%arg0: i32, %arg1: i32) -> (i32, i32, i32) {
    %c0_i32 = arith.constant 0 : i32
    %c0_i32_0 = arith.constant 0 : i32
    return %arg1, %arg0, %c0_i32 : i32, i32, i32
  }
  func.func @transform_2(%arg0: i32, %arg1: i32) -> (i32, i32, i32) {
    %c0_i32 = arith.constant 0 : i32
    %c0_i32_0 = arith.constant 0 : i32
    return %arg1, %arg0, %c0_i32 : i32, i32, i32
  }
}

</mosaic_0001>

<llo_original>
// kernel: tpu_custom_call.1
$region0: #{tpu_custom_call.1}
  #allocation0 [shape = 'u32[]', space=smem, size = 0x4, offset = 0x4, fixed_abs, tag = 'smem constant byte address 0x4 - core index']
  #allocation1 [shape = 'u32[144,128]{1,0:T(1,128)}', space=vmem, size = 0x12000, scoped, tag = 'internal scratch']
  %s0 = inlined_call_operand.hbm [shape: f32[8,16], index: 0, kind: input, shape index: {}]
  %s1 = inlined_call_operand.vmem [shape: f32[1,8,1], index: 1, kind: output, shape index: {0}]
  %s2 = inlined_call_operand.vmem [shape: f32[1,8,1], index: 2, kind: output, shape index: {1}]
  %3 = xla_tuple %s1, %s2
  %s4 = sld [smem:[#allocation0]]
  $region26: #{tpu_custom_call.1} parent=0
    _
  %s6 = ssub.s32 1, %s4
  %s7 = scalar_select 0, %s6, %s4
  $region1: #{tpu_custom_call.1} parent=0
    #allocation2 [shape = 'u8[4096]{0}', space=vmem, size = 0x1000, scoped, tag = 'input window, operand 0, single buffered']
    #allocation3 [shape = 's32[1]{0}', space=sflag, size = 0x4, scoped, tag = 'scoped memory for tpu_custom_call.1']
    %8 = vsyncpa [#allocation3], 0
    // Predicated region
    $region2: #{tpu_custom_call.1} parent=1 // pred_check
      _
    $region3: #{tpu_custom_call.1} parent=1 // pred_check_branch
      %10 = sbr.rel (0) target = $region5
    $region4: #{tpu_custom_call.1} parent=1 // pred_region
      %s12 = ssub.s32 128, 128
      %13 = vsyncadd [#allocation3], %s12
      %s15 = sshll.u32 [#allocation2], 4
      %s16 = int_to_ptr.vmem [resolvable:$true] %s15
      %18 = dma.hbm_to_vmem [thread:$0]  %s0, 128, %s16, [#allocation3]
    $region5: #{tpu_custom_call.1} parent=1 // pred_fallthru
      _
    // Predicated region
    $region6: #{tpu_custom_call.1} parent=1 // pred_check
      _
    $region7: #{tpu_custom_call.1} parent=1 // pred_check_branch
      %20 = sbr.rel (0) target = $region9
    $region8: #{tpu_custom_call.1} parent=1 // pred_region
      %21 = dma.done [#allocation3], 128
    $region9: #{tpu_custom_call.1} parent=1 // pred_fallthru
      _
    %v22 = vld [vmem:[#allocation2] sm:$0xff]
    %vm23 = vcmask 130048
    %v24 = vsel %vm23, %v22, 0.0
    %25 = vadd.xlane.f32.xlu0 %v24
    %v26 = vpop.xlane.xlu0 %25
    %v27 = vrcp.pop 16.0
    %v28 = vmul.f32 %v26, %v27
    %v29 = vsub.f32 %v22, %v28
    %vm30 = vcmask 7168
    %31 = vst.msk [vmem:[%s1] sm:$0xff] %vm30, %v26
    %v32 = vmul.f32 %v29, %v29
    %v33 = vsel %vm23, %v32, 0.0
    %34 = vadd.xlane.f32.xlu0 %v33
    %v35 = vpop.xlane.xlu0 %34
    %36 = vst.msk [vmem:[%s2] sm:$0xff] %vm30, %v35
    // Predicated region
    $region10: #{tpu_custom_call.1} parent=1 // pred_check
      _
    $region11: #{tpu_custom_call.1} parent=1 // pred_check_branch
      %38 = sbr.rel (0) target = $region13
    $region12: #{tpu_custom_call.1} parent=1 // pred_region
      _
    $region13: #{tpu_custom_call.1} parent=1 // pred_fallthru
      _
    // Predicated region
    $region14: #{tpu_custom_call.1} parent=1 // pred_check
      _
    $region15: #{tpu_custom_call.1} parent=1 // pred_check_branch
      %40 = sbr.rel (0) target = $region17
    $region16: #{tpu_custom_call.1} parent=1 // pred_region
      _
    $region17: #{tpu_custom_call.1} parent=1 // pred_fallthru
      _
    // Predicated region
    $region18: #{tpu_custom_call.1} parent=1 // pred_check
      _
    $region19: #{tpu_custom_call.1} parent=1 // pred_check_branch
      %42 = sbr.rel (0) target = $region21
    $region20: #{tpu_custom_call.1} parent=1 // pred_region
      _
    $region21: #{tpu_custom_call.1} parent=1 // pred_fallthru
      _
    // Predicated region
    $region22: #{tpu_custom_call.1} parent=1 // pred_check
      _
    $region23: #{tpu_custom_call.1} parent=1 // pred_check_branch
      %44 = sbr.rel (0) target = $region25
    $region24: #{tpu_custom_call.1} parent=1 // pred_region
      _
    $region25: #{tpu_custom_call.1} parent=1 // pred_fallthru
      _
    %45 = vsyncpa [#allocation3], 1

</llo_original>
